<compile_context>
chip_gen: v5e
topology: v5e:2x2
jax: 0.10.0
libtpu: 0.0.40
codegen_flags: <defaults>
</compile_context>

<pallas_src>
import functools

import jax
import jax.numpy as jnp
from jax.experimental import pallas as pl
from jax.experimental.pallas import tpu as pltpu


# ----------------------------- Pallas kernel -------------------------------

def _nsr_kernel(x_ref, g_ref, b_ref, wwt_ref, wh_ref, wc_ref, o_ref, z_ref, *, eps, act_dtype):
    # x_ref  : (1, C, H, W)      input image block (full image, native NCHW / native dtype)
    # g_ref  : (C,)       SMEM   LayerNorm gamma
    # b_ref  : (C,)       SMEM   LayerNorm beta
    # wwt_ref: (W, Wout)  VMEM   bf16 W-axis bilinear matrix (transposed)
    # wh_ref : (th, H)    VMEM   bf16 H-axis bilinear matrix, one Hout-row tile per grid step
    # wc_ref : (Cout, C)  SMEM   1x1 conv weight (bias=False)
    # o_ref  : (1, Cout, th, Wout)
    # z_ref  : (H, C*Wout) bf16  VMEM scratch: W-resized tanh(norm(x)), channels folded in lanes
    C = x_ref.shape[1]
    H = x_ref.shape[2]
    Cout = o_ref.shape[1]
    Wout = o_ref.shape[3]

    # ---- Phase 1 (once per image, at tile 0): ChannelNorm -> tanh -> W-axis resize ----
    # NOTE: the z scratch carries state from tile 0 into later tiles of the same image; this is
    # only valid while the tile grid axis stays "arbitrary" (sequential on a single core).
    @pl.when(pl.program_id(1) == 0)
    def _():
        x = x_ref[0].astype(jnp.float32)                      # (C, H, W), lanes = W
        # per-pixel mean / biased variance over channels (tiny leading C dim -> plain VPU adds)
        s = x[0]
        for c in range(1, C):
            s = s + x[c]
        mean = s * (1.0 / C)                                  # (H, W)
        ss = jnp.square(x[0] - mean)
        for c in range(1, C):
            ss = ss + jnp.square(x[c] - mean)
        inv = jax.lax.rsqrt(ss * (1.0 / C) + eps)             # (H, W)

        # affine (per-channel SMEM scalars) + tanh; bf16 on v6e/v7x (bf16 EUP), f32 on v5e
        ys = []
        for c in range(C):
            a = (x[c] - mean) * inv * g_ref[c] + b_ref[c]     # (H, W) f32
            ys.append(jnp.tanh(a.astype(act_dtype)).astype(jnp.bfloat16))
        y = jnp.concatenate(ys, axis=0)                       # (C*H, W) bf16

        # single W-axis resize matmul over all channels (bf16 operands, f32 accumulation)
        zz = jnp.dot(y, wwt_ref[...], preferred_element_type=jnp.float32)   # (C*H, Wout) f32
        # fold channels into lanes for phase 2: z[h, c*Wout + v]; one full aligned store
        z_ref[...] = jnp.concatenate(
            [zz[c * H:(c + 1) * H, :] for c in range(C)], axis=1
        ).astype(jnp.bfloat16)                                # (H, C*Wout)

    # ---- Phase 2 (per Hout-row tile): H-axis resize + 1x1 conv -------------
    # one matmul with C*Wout lanes instead of C narrow per-channel dots
    t = jnp.dot(wh_ref[...], z_ref[...], preferred_element_type=jnp.float32)  # (th, C*Wout)

    # 1x1 conv (bias=False): Cin = Cout = 4 -> a handful of scalar FMAs on the VPU.
    # TODO(synk): for wide channel counts switch this to an MXU dot, and for upsampling apply
    # the channel mix before the resizes (smaller spatial area); also tile phase 1 along H for
    # very large images on v7x's 64 MiB VMEM.
    outs = []
    for d in range(Cout):
        acc = t[:, 0:Wout] * wc_ref[d, 0]
        for c in range(1, C):
            acc = acc + t[:, c * Wout:(c + 1) * Wout] * wc_ref[d, c]
        outs.append(acc)
    # one (Cout, th, Wout) slab store per tile instead of Cout separate narrow stores
    o_ref[0] = jnp.stack(outs, axis=0).astype(o_ref.dtype)


# ----------------------------- glue / wrapper ------------------------------

def _bilinear_matrix(in_size, out_size):
    """Dense (out_size, in_size) matrix reproducing F.interpolate bilinear, align_corners=True."""
    if out_size == 1:
        src = jnp.zeros((1,), dtype=jnp.float32)
    else:
        src = jnp.arange(out_size, dtype=jnp.float32) * ((in_size - 1) / (out_size - 1))
    i0 = jnp.clip(jnp.floor(src).astype(jnp.int32), 0, in_size - 1)
    i1 = jnp.minimum(i0 + 1, in_size - 1)
    frac = src - i0.astype(jnp.float32)
    rows = jnp.arange(out_size)
    m = jnp.zeros((out_size, in_size), dtype=jnp.float32)
    m = m.at[rows, i0].add(1.0 - frac)
    m = m.at[rows, i1].add(frac)
    return m


def _vmem_capacity_bytes():
    """Physical VMEM of the attached chip; conservative (v7x-sized) fallback if the query fails."""
    try:
        return int(pltpu.get_tpu_info().vmem_capacity_bytes)
    except Exception:
        return 64 * 2**20


def _has_bf16_vpu():
    """True on chips with bf16 VPU/EUP (v6e / v7x); False on v5e and older."""
    try:
        kind = jax.devices()[0].device_kind.lower()
    except Exception:
        return False
    return not any(v in kind for v in ("v2", "v3", "v4", "v5"))


def _pick_h_tile(h_out, w_out, c_out, target_bytes):
    """Largest Hout-row tile (multiple of 8, dividing Hout) whose f32 output block fits the
    per-chip budget; fall back to a single full tile for small / odd shapes."""
    full_bytes = c_out * h_out * w_out * 4
    if full_bytes <= target_bytes or h_out % 8 != 0:
        return h_out
    cands = [th for th in range(8, h_out + 1, 8)
             if h_out % th == 0 and c_out * th * w_out * 4 <= target_bytes]
    return max(cands) if cands else 8


def norm_squash_resize(x_nchw, gamma, beta, conv_w, out_size, eps=1e-5):
    """x_nchw: (N, C, H, W); conv_w: (Cout, Cin, 1, 1), bias=False. Returns (N, Cout, Hout, Wout)."""
    N, C, H, W = x_nchw.shape
    Cout = conv_w.shape[0]
    Hout, Wout = out_size

    g = gamma.reshape(C).astype(jnp.float32)
    b = beta.reshape(C).astype(jnp.float32)
    wwt = _bilinear_matrix(W, Wout).T.astype(jnp.bfloat16)   # (W, Wout)  pre-cast to bf16
    wh = _bilinear_matrix(H, Hout).astype(jnp.bfloat16)      # (Hout, H)  pre-cast to bf16
    wc = conv_w[:, :, 0, 0].astype(jnp.float32)              # (Cout, Cin) -> SMEM scalars

    vmem_cap = _vmem_capacity_bytes()
    th = _pick_h_tile(Hout, Wout, Cout, target_bytes=vmem_cap // 16)
    n_ht = Hout // th

    # VMEM budget (double-buffered blocks + scratch + temporaries), generation-aware:
    # capped at ~80% of the chip's physical VMEM so v7x keeps compiler headroom while
    # v5e/v6e can use their larger 128 MiB.
    est = (2 * C * H * W * x_nchw.dtype.itemsize   # x block x2
           + H * C * Wout * 2                      # bf16 z scratch
           + 2 * Cout * th * Wout * 4              # output block x2
           + 2 * (W * Wout + th * H) * 2           # bf16 resize weights x2
           + 8 * C * H * max(W, Wout) * 4)         # in-kernel f32 temporaries (headroom)
    vmem_limit = int(min(0.8 * vmem_cap, max(32 * 2**20, 2 * est)))

    act_dtype = jnp.bfloat16 if _has_bf16_vpu() else jnp.float32

    kernel = functools.partial(_nsr_kernel, eps=eps, act_dtype=act_dtype)
    out = pl.pallas_call(
        kernel,
        out_shape=jax.ShapeDtypeStruct((N, Cout, Hout, Wout), jnp.float32),
        grid_spec=pltpu.PrefetchScalarGridSpec(
            num_scalar_prefetch=0,
            grid=(N, n_ht),
            in_specs=[
                pl.BlockSpec((1, C, H, W), lambda n, t: (n, 0, 0, 0)),       # x (resident per n)
                pl.BlockSpec(memory_space=pltpu.MemorySpace.SMEM),           # gamma
                pl.BlockSpec(memory_space=pltpu.MemorySpace.SMEM),           # beta
                pl.BlockSpec((W, Wout), lambda n, t: (0, 0)),                # Ww^T (resident)
                pl.BlockSpec((th, H), lambda n, t: (t, 0)),                  # Wh row-tile
                pl.BlockSpec(memory_space=pltpu.MemorySpace.SMEM),           # conv weight
            ],
            out_specs=pl.BlockSpec((1, Cout, th, Wout), lambda n, t: (n, 0, t, 0)),
            scratch_shapes=[pltpu.VMEM((H, C * Wout), jnp.bfloat16)],        # W-resized activations
        ),
        compiler_params=pltpu.CompilerParams(
            # z scratch is carried from tile 0 to later tiles of an image -> the tile axis must
            # stay "arbitrary"; the batch axis is safe to split across cores (megacore / v7x).
            dimension_semantics=("parallel", "arbitrary"),
            vmem_limit_bytes=vmem_limit,
        ),
    )(x_nchw, g, b, wwt, wh, wc)
    return out


# ------------------------- pure-JAX reference ------------------------------

def _reference(x_nchw, gamma, beta, conv_w, out_size, eps=1e-5):
    xh = jnp.transpose(x_nchw, (0, 2, 3, 1)).astype(jnp.float32)        # NHWC
    mean = xh.mean(-1, keepdims=True)
    var = ((xh - mean) ** 2).mean(-1, keepdims=True)
    y = (xh - mean) / jnp.sqrt(var + eps) * gamma + beta
    y = jnp.tanh(y)
    wh = _bilinear_matrix(x_nchw.shape[2], out_size[0])
    ww = _bilinear_matrix(x_nchw.shape[3], out_size[1])
    y = jnp.einsum('uh,nhwc->nuwc', wh, y)
    y = jnp.einsum('vw,nuwc->nuvc', ww, y)
    y = jnp.einsum('nuvc,dc->nduv', y, conv_w[:, :, 0, 0])
    return y


# --------------------------------- main -------------------------------------

if __name__ == "__main__":
    key = jax.random.PRNGKey(0)
    k_x, k_g, k_b, k_w = jax.random.split(key, 4)

    N, C, H, W = 2, 4, 16, 16
    out_size = (8, 8)

    x = jax.random.normal(k_x, (N, C, H, W), dtype=jnp.float32)
    gamma = 1.0 + 0.1 * jax.random.normal(k_g, (C,), dtype=jnp.float32)
    beta = 0.1 * jax.random.normal(k_b, (C,), dtype=jnp.float32)
    conv_w = jax.random.normal(k_w, (C, C, 1, 1), dtype=jnp.float32) / jnp.sqrt(C)

    out = jax.block_until_ready(norm_squash_resize(x, gamma, beta, conv_w, out_size))
    ref = _reference(x, gamma, beta, conv_w, out_size)

    assert out.shape == (N, C, out_size[0], out_size[1]), out.shape
    max_err = float(jnp.max(jnp.abs(out - ref)))
    # bf16 resize-matmul operands / bf16 z intermediate (f32 accumulation) -> tolerance vs f32 ref
    assert jnp.allclose(out, ref, rtol=2e-2, atol=2e-2), max_err

    print("KERNEL_OK")
</pallas_src>

<mosaic_0001>
module attributes {stable_mosaic.version = 11 : i64} {
  func.func @_nsr_kernel(%arg0: i32, %arg1: i32, %arg2: memref<1x4x16x16xf32, #tpu.memory_space<vmem>>, %arg3: memref<4xf32, #tpu.memory_space<smem>>, %arg4: memref<4xf32, #tpu.memory_space<smem>>, %arg5: memref<16x8xbf16, #tpu.memory_space<vmem>>, %arg6: memref<8x16xbf16, #tpu.memory_space<vmem>>, %arg7: memref<4x4xf32, #tpu.memory_space<smem>>, %arg8: memref<1x4x8x8xf32, #tpu.memory_space<vmem>>, %arg9: memref<16x32xbf16, #tpu.memory_space<vmem>>) attributes {dimension_semantics = [#tpu.dimension_semantics<parallel>, #tpu.dimension_semantics<arbitrary>], iteration_bounds = array<i64: 2, 1>, scalar_prefetch = 0 : i64, scratch_operands = 1 : i64, tpu.core_type = #tpu.core_type<tc>, window_params = [{transform_indices = @transform_0, window_bounds = array<i64: 1, 4, 16, 16>}, {transform_indices = @transform_1, window_bounds = array<i64: 4>}, {transform_indices = @transform_2, window_bounds = array<i64: 4>}, {pipeline_mode = #tpu.pipeline_mode<synchronous>, transform_indices = @transform_3, window_bounds = array<i64: 16, 8>}, {transform_indices = @transform_4, window_bounds = array<i64: 8, 16>}, {transform_indices = @transform_5, window_bounds = array<i64: 4, 4>}, {transform_indices = @transform_6, window_bounds = array<i64: 1, 4, 8, 8>}]} {
    %c0_i32 = arith.constant 0 : i32
    %0 = arith.cmpi eq, %arg1, %c0_i32 : i32
    %1 = arith.extui %0 : i1 to i32
    %c0_i32_0 = arith.constant 0 : i32
    %2 = arith.cmpi ne, %1, %c0_i32_0 : i32
    scf.if %2 {
      %c0_37 = arith.constant 0 : index
      %c0_38 = arith.constant 0 : index
      %c0_39 = arith.constant 0 : index
      %c0_40 = arith.constant 0 : index
      %90 = vector.load %arg2[%c0_37, %c0_38, %c0_39, %c0_40] : memref<1x4x16x16xf32, #tpu.memory_space<vmem>>, vector<1x4x16x16xf32>
      %91 = vector.shape_cast %90 : vector<1x4x16x16xf32> to vector<4x16x16xf32>
      %92 = vector.extract_strided_slice %91 {offsets = [0, 0, 0], sizes = [1, 16, 16], strides = [1, 1, 1]} : vector<4x16x16xf32> to vector<1x16x16xf32>
      %93 = vector.shape_cast %92 : vector<1x16x16xf32> to vector<16x16xf32>
      %94 = vector.extract_strided_slice %91 {offsets = [1, 0, 0], sizes = [1, 16, 16], strides = [1, 1, 1]} : vector<4x16x16xf32> to vector<1x16x16xf32>
      %95 = vector.shape_cast %94 : vector<1x16x16xf32> to vector<16x16xf32>
      %96 = arith.addf %93, %95 : vector<16x16xf32>
      %97 = vector.extract_strided_slice %91 {offsets = [2, 0, 0], sizes = [1, 16, 16], strides = [1, 1, 1]} : vector<4x16x16xf32> to vector<1x16x16xf32>
      %98 = vector.shape_cast %97 : vector<1x16x16xf32> to vector<16x16xf32>
      %99 = arith.addf %96, %98 : vector<16x16xf32>
      %100 = vector.extract_strided_slice %91 {offsets = [3, 0, 0], sizes = [1, 16, 16], strides = [1, 1, 1]} : vector<4x16x16xf32> to vector<1x16x16xf32>
      %101 = vector.shape_cast %100 : vector<1x16x16xf32> to vector<16x16xf32>
      %102 = arith.addf %99, %101 : vector<16x16xf32>
      %cst_41 = arith.constant 2.500000e-01 : f32
      %103 = vector.broadcast %cst_41 : f32 to vector<16x16xf32>
      %104 = arith.mulf %102, %103 : vector<16x16xf32>
      %105 = vector.extract_strided_slice %91 {offsets = [0, 0, 0], sizes = [1, 16, 16], strides = [1, 1, 1]} : vector<4x16x16xf32> to vector<1x16x16xf32>
      %106 = vector.shape_cast %105 : vector<1x16x16xf32> to vector<16x16xf32>
      %107 = arith.subf %106, %104 : vector<16x16xf32>
      %108 = arith.mulf %107, %107 : vector<16x16xf32>
      %109 = vector.extract_strided_slice %91 {offsets = [1, 0, 0], sizes = [1, 16, 16], strides = [1, 1, 1]} : vector<4x16x16xf32> to vector<1x16x16xf32>
      %110 = vector.shape_cast %109 : vector<1x16x16xf32> to vector<16x16xf32>
      %111 = arith.subf %110, %104 : vector<16x16xf32>
      %112 = arith.mulf %111, %111 : vector<16x16xf32>
      %113 = arith.addf %108, %112 : vector<16x16xf32>
      %114 = vector.extract_strided_slice %91 {offsets = [2, 0, 0], sizes = [1, 16, 16], strides = [1, 1, 1]} : vector<4x16x16xf32> to vector<1x16x16xf32>
      %115 = vector.shape_cast %114 : vector<1x16x16xf32> to vector<16x16xf32>
      %116 = arith.subf %115, %104 : vector<16x16xf32>
      %117 = arith.mulf %116, %116 : vector<16x16xf32>
      %118 = arith.addf %113, %117 : vector<16x16xf32>
      %119 = vector.extract_strided_slice %91 {offsets = [3, 0, 0], sizes = [1, 16, 16], strides = [1, 1, 1]} : vector<4x16x16xf32> to vector<1x16x16xf32>
      %120 = vector.shape_cast %119 : vector<1x16x16xf32> to vector<16x16xf32>
      %121 = arith.subf %120, %104 : vector<16x16xf32>
      %122 = arith.mulf %121, %121 : vector<16x16xf32>
      %123 = arith.addf %118, %122 : vector<16x16xf32>
      %cst_42 = arith.constant 2.500000e-01 : f32
      %124 = vector.broadcast %cst_42 : f32 to vector<16x16xf32>
      %125 = arith.mulf %123, %124 : vector<16x16xf32>
      %cst_43 = arith.constant 9.99999974E-6 : f32
      %126 = vector.broadcast %cst_43 : f32 to vector<16x16xf32>
      %127 = arith.addf %125, %126 : vector<16x16xf32>
      %128 = math.rsqrt %127 : vector<16x16xf32>
      %129 = vector.extract_strided_slice %91 {offsets = [0, 0, 0], sizes = [1, 16, 16], strides = [1, 1, 1]} : vector<4x16x16xf32> to vector<1x16x16xf32>
      %130 = vector.shape_cast %129 : vector<1x16x16xf32> to vector<16x16xf32>
      %131 = arith.subf %130, %104 : vector<16x16xf32>
      %132 = arith.mulf %131, %128 : vector<16x16xf32>
      %c0_44 = arith.constant 0 : index
      %133 = memref.load %arg3[%c0_44] : memref<4xf32, #tpu.memory_space<smem>>
      %134 = vector.broadcast %133 : f32 to vector<16x16xf32>
      %135 = arith.mulf %132, %134 : vector<16x16xf32>
      %c0_45 = arith.constant 0 : index
      %136 = memref.load %arg4[%c0_45] : memref<4xf32, #tpu.memory_space<smem>>
      %137 = vector.broadcast %136 : f32 to vector<16x16xf32>
      %138 = arith.addf %135, %137 : vector<16x16xf32>
      %139 = arith.truncf %138 : vector<16x16xf32> to vector<16x16xbf16>
      %140 = math.tanh %139 : vector<16x16xbf16>
      %141 = vector.extract_strided_slice %91 {offsets = [1, 0, 0], sizes = [1, 16, 16], strides = [1, 1, 1]} : vector<4x16x16xf32> to vector<1x16x16xf32>
      %142 = vector.shape_cast %141 : vector<1x16x16xf32> to vector<16x16xf32>
      %143 = arith.subf %142, %104 : vector<16x16xf32>
      %144 = arith.mulf %143, %128 : vector<16x16xf32>
      %c1_46 = arith.constant 1 : index
      %145 = memref.load %arg3[%c1_46] : memref<4xf32, #tpu.memory_space<smem>>
      %146 = vector.broadcast %145 : f32 to vector<16x16xf32>
      %147 = arith.mulf %144, %146 : vector<16x16xf32>
      %c1_47 = arith.constant 1 : index
      %148 = memref.load %arg4[%c1_47] : memref<4xf32, #tpu.memory_space<smem>>
      %149 = vector.broadcast %148 : f32 to vector<16x16xf32>
      %150 = arith.addf %147, %149 : vector<16x16xf32>
      %151 = arith.truncf %150 : vector<16x16xf32> to vector<16x16xbf16>
      %152 = math.tanh %151 : vector<16x16xbf16>
      %153 = vector.extract_strided_slice %91 {offsets = [2, 0, 0], sizes = [1, 16, 16], strides = [1, 1, 1]} : vector<4x16x16xf32> to vector<1x16x16xf32>
      %154 = vector.shape_cast %153 : vector<1x16x16xf32> to vector<16x16xf32>
      %155 = arith.subf %154, %104 : vector<16x16xf32>
      %156 = arith.mulf %155, %128 : vector<16x16xf32>
      %c2_48 = arith.constant 2 : index
      %157 = memref.load %arg3[%c2_48] : memref<4xf32, #tpu.memory_space<smem>>
      %158 = vector.broadcast %157 : f32 to vector<16x16xf32>
      %159 = arith.mulf %156, %158 : vector<16x16xf32>
      %c2_49 = arith.constant 2 : index
      %160 = memref.load %arg4[%c2_49] : memref<4xf32, #tpu.memory_space<smem>>
      %161 = vector.broadcast %160 : f32 to vector<16x16xf32>
      %162 = arith.addf %159, %161 : vector<16x16xf32>
      %163 = arith.truncf %162 : vector<16x16xf32> to vector<16x16xbf16>
      %164 = math.tanh %163 : vector<16x16xbf16>
      %165 = vector.extract_strided_slice %91 {offsets = [3, 0, 0], sizes = [1, 16, 16], strides = [1, 1, 1]} : vector<4x16x16xf32> to vector<1x16x16xf32>
      %166 = vector.shape_cast %165 : vector<1x16x16xf32> to vector<16x16xf32>
      %167 = arith.subf %166, %104 : vector<16x16xf32>
      %168 = arith.mulf %167, %128 : vector<16x16xf32>
      %c3_50 = arith.constant 3 : index
      %169 = memref.load %arg3[%c3_50] : memref<4xf32, #tpu.memory_space<smem>>
      %170 = vector.broadcast %169 : f32 to vector<16x16xf32>
      %171 = arith.mulf %168, %170 : vector<16x16xf32>
      %c3_51 = arith.constant 3 : index
      %172 = memref.load %arg4[%c3_51] : memref<4xf32, #tpu.memory_space<smem>>
      %173 = vector.broadcast %172 : f32 to vector<16x16xf32>
      %174 = arith.addf %171, %173 : vector<16x16xf32>
      %175 = arith.truncf %174 : vector<16x16xf32> to vector<16x16xbf16>
      %176 = math.tanh %175 : vector<16x16xbf16>
      %177 = tpu.concatenate %140, %152, %164, %176 in 0 : vector<16x16xbf16>, vector<16x16xbf16>, vector<16x16xbf16>, vector<16x16xbf16> -> vector<64x16xbf16>
      %c0_52 = arith.constant 0 : index
      %c0_53 = arith.constant 0 : index
      %178 = vector.load %arg5[%c0_52, %c0_53] : memref<16x8xbf16, #tpu.memory_space<vmem>>, vector<16x8xbf16>
      %cst_54 = arith.constant dense<0.000000e+00> : vector<64x8xf32>
      %179 = tpu.matmul %177, %178, %cst_54 {dimension_numbers = #tpu.dot_dimension_numbers<[1], [0], [0], [1], [0, 0, 1, 1], [], []>} : vector<64x16xbf16>, vector<16x8xbf16>, vector<64x8xf32> -> vector<64x8xf32>
      %180 = vector.extract_strided_slice %179 {offsets = [0, 0], sizes = [16, 8], strides = [1, 1]} : vector<64x8xf32> to vector<16x8xf32>
      %181 = vector.extract_strided_slice %179 {offsets = [16, 0], sizes = [16, 8], strides = [1, 1]} : vector<64x8xf32> to vector<16x8xf32>
      %182 = vector.extract_strided_slice %179 {offsets = [32, 0], sizes = [16, 8], strides = [1, 1]} : vector<64x8xf32> to vector<16x8xf32>
      %183 = vector.extract_strided_slice %179 {offsets = [48, 0], sizes = [16, 8], strides = [1, 1]} : vector<64x8xf32> to vector<16x8xf32>
      %184 = tpu.concatenate %180, %181, %182, %183 in 1 : vector<16x8xf32>, vector<16x8xf32>, vector<16x8xf32>, vector<16x8xf32> -> vector<16x32xf32>
      %185 = arith.truncf %184 : vector<16x32xf32> to vector<16x32xbf16>
      %c0_55 = arith.constant 0 : index
      %c0_56 = arith.constant 0 : index
      %186 = vector.load %arg9[%c0_55, %c0_56] : memref<16x32xbf16, #tpu.memory_space<vmem>>, vector<16x32xbf16>
      tpu.vector_store %arg9[%c0_55, %c0_56], %185 {strides = array<i32>} : memref<16x32xbf16, #tpu.memory_space<vmem>>, vector<16x32xbf16>,
    } else {
    }
    %c0 = arith.constant 0 : index
    %c0_1 = arith.constant 0 : index
    %3 = vector.load %arg6[%c0, %c0_1] : memref<8x16xbf16, #tpu.memory_space<vmem>>, vector<8x16xbf16>
    %c0_2 = arith.constant 0 : index
    %c0_3 = arith.constant 0 : index
    %4 = vector.load %arg9[%c0_2, %c0_3] : memref<16x32xbf16, #tpu.memory_space<vmem>>, vector<16x32xbf16>
    %cst = arith.constant dense<0.000000e+00> : vector<8x32xf32>
    %5 = tpu.matmul %3, %4, %cst {dimension_numbers = #tpu.dot_dimension_numbers<[1], [0], [0], [1], [0, 0, 1, 1], [], []>} : vector<8x16xbf16>, vector<16x32xbf16>, vector<8x32xf32> -> vector<8x32xf32>
    %6 = vector.extract_strided_slice %5 {offsets = [0, 0], sizes = [8, 8], strides = [1, 1]} : vector<8x32xf32> to vector<8x8xf32>
    %c0_4 = arith.constant 0 : index
    %c0_5 = arith.constant 0 : index
    %7 = memref.load %arg7[%c0_4, %c0_5] : memref<4x4xf32, #tpu.memory_space<smem>>
    %8 = vector.broadcast %7 : f32 to vector<8x8xf32>
    %9 = arith.mulf %6, %8 : vector<8x8xf32>
    %10 = vector.extract_strided_slice %5 {offsets = [0, 8], sizes = [8, 8], strides = [1, 1]} : vector<8x32xf32> to vector<8x8xf32>
    %c0_6 = arith.constant 0 : index
    %c1 = arith.constant 1 : index
    %11 = memref.load %arg7[%c0_6, %c1] : memref<4x4xf32, #tpu.memory_space<smem>>
    %12 = vector.broadcast %11 : f32 to vector<8x8xf32>
    %13 = arith.mulf %10, %12 : vector<8x8xf32>
    %14 = arith.addf %9, %13 : vector<8x8xf32>
    %15 = vector.extract_strided_slice %5 {offsets = [0, 16], sizes = [8, 8], strides = [1, 1]} : vector<8x32xf32> to vector<8x8xf32>
    %c0_7 = arith.constant 0 : index
    %c2 = arith.constant 2 : index
    %16 = memref.load %arg7[%c0_7, %c2] : memref<4x4xf32, #tpu.memory_space<smem>>
    %17 = vector.broadcast %16 : f32 to vector<8x8xf32>
    %18 = arith.mulf %15, %17 : vector<8x8xf32>
    %19 = arith.addf %14, %18 : vector<8x8xf32>
    %20 = vector.extract_strided_slice %5 {offsets = [0, 24], sizes = [8, 8], strides = [1, 1]} : vector<8x32xf32> to vector<8x8xf32>
    %c0_8 = arith.constant 0 : index
    %c3 = arith.constant 3 : index
    %21 = memref.load %arg7[%c0_8, %c3] : memref<4x4xf32, #tpu.memory_space<smem>>
    %22 = vector.broadcast %21 : f32 to vector<8x8xf32>
    %23 = arith.mulf %20, %22 : vector<8x8xf32>
    %24 = arith.addf %19, %23 : vector<8x8xf32>
    %25 = vector.extract_strided_slice %5 {offsets = [0, 0], sizes = [8, 8], strides = [1, 1]} : vector<8x32xf32> to vector<8x8xf32>
    %c1_9 = arith.constant 1 : index
    %c0_10 = arith.constant 0 : index
    %26 = memref.load %arg7[%c1_9, %c0_10] : memref<4x4xf32, #tpu.memory_space<smem>>
    %27 = vector.broadcast %26 : f32 to vector<8x8xf32>
    %28 = arith.mulf %25, %27 : vector<8x8xf32>
    %29 = vector.extract_strided_slice %5 {offsets = [0, 8], sizes = [8, 8], strides = [1, 1]} : vector<8x32xf32> to vector<8x8xf32>
    %c1_11 = arith.constant 1 : index
    %c1_12 = arith.constant 1 : index
    %30 = memref.load %arg7[%c1_11, %c1_12] : memref<4x4xf32, #tpu.memory_space<smem>>
    %31 = vector.broadcast %30 : f32 to vector<8x8xf32>
    %32 = arith.mulf %29, %31 : vector<8x8xf32>
    %33 = arith.addf %28, %32 : vector<8x8xf32>
    %34 = vector.extract_strided_slice %5 {offsets = [0, 16], sizes = [8, 8], strides = [1, 1]} : vector<8x32xf32> to vector<8x8xf32>
    %c1_13 = arith.constant 1 : index
    %c2_14 = arith.constant 2 : index
    %35 = memref.load %arg7[%c1_13, %c2_14] : memref<4x4xf32, #tpu.memory_space<smem>>
    %36 = vector.broadcast %35 : f32 to vector<8x8xf32>
    %37 = arith.mulf %34, %36 : vector<8x8xf32>
    %38 = arith.addf %33, %37 : vector<8x8xf32>
    %39 = vector.extract_strided_slice %5 {offsets = [0, 24], sizes = [8, 8], strides = [1, 1]} : vector<8x32xf32> to vector<8x8xf32>
    %c1_15 = arith.constant 1 : index
    %c3_16 = arith.constant 3 : index
    %40 = memref.load %arg7[%c1_15, %c3_16] : memref<4x4xf32, #tpu.memory_space<smem>>
    %41 = vector.broadcast %40 : f32 to vector<8x8xf32>
    %42 = arith.mulf %39, %41 : vector<8x8xf32>
    %43 = arith.addf %38, %42 : vector<8x8xf32>
    %44 = vector.extract_strided_slice %5 {offsets = [0, 0], sizes = [8, 8], strides = [1, 1]} : vector<8x32xf32> to vector<8x8xf32>
    %c2_17 = arith.constant 2 : index
    %c0_18 = arith.constant 0 : index
    %45 = memref.load %arg7[%c2_17, %c0_18] : memref<4x4xf32, #tpu.memory_space<smem>>
    %46 = vector.broadcast %45 : f32 to vector<8x8xf32>
    %47 = arith.mulf %44, %46 : vector<8x8xf32>
    %48 = vector.extract_strided_slice %5 {offsets = [0, 8], sizes = [8, 8], strides = [1, 1]} : vector<8x32xf32> to vector<8x8xf32>
    %c2_19 = arith.constant 2 : index
    %c1_20 = arith.constant 1 : index
    %49 = memref.load %arg7[%c2_19, %c1_20] : memref<4x4xf32, #tpu.memory_space<smem>>
    %50 = vector.broadcast %49 : f32 to vector<8x8xf32>
    %51 = arith.mulf %48, %50 : vector<8x8xf32>
    %52 = arith.addf %47, %51 : vector<8x8xf32>
    %53 = vector.extract_strided_slice %5 {offsets = [0, 16], sizes = [8, 8], strides = [1, 1]} : vector<8x32xf32> to vector<8x8xf32>
    %c2_21 = arith.constant 2 : index
    %c2_22 = arith.constant 2 : index
    %54 = memref.load %arg7[%c2_21, %c2_22] : memref<4x4xf32, #tpu.memory_space<smem>>
    %55 = vector.broadcast %54 : f32 to vector<8x8xf32>
    %56 = arith.mulf %53, %55 : vector<8x8xf32>
    %57 = arith.addf %52, %56 : vector<8x8xf32>
    %58 = vector.extract_strided_slice %5 {offsets = [0, 24], sizes = [8, 8], strides = [1, 1]} : vector<8x32xf32> to vector<8x8xf32>
    %c2_23 = arith.constant 2 : index
    %c3_24 = arith.constant 3 : index
    %59 = memref.load %arg7[%c2_23, %c3_24] : memref<4x4xf32, #tpu.memory_space<smem>>
    %60 = vector.broadcast %59 : f32 to vector<8x8xf32>
    %61 = arith.mulf %58, %60 : vector<8x8xf32>
    %62 = arith.addf %57, %61 : vector<8x8xf32>
    %63 = vector.extract_strided_slice %5 {offsets = [0, 0], sizes = [8, 8], strides = [1, 1]} : vector<8x32xf32> to vector<8x8xf32>
    %c3_25 = arith.constant 3 : index
    %c0_26 = arith.constant 0 : index
    %64 = memref.load %arg7[%c3_25, %c0_26] : memref<4x4xf32, #tpu.memory_space<smem>>
    %65 = vector.broadcast %64 : f32 to vector<8x8xf32>
    %66 = arith.mulf %63, %65 : vector<8x8xf32>
    %67 = vector.extract_strided_slice %5 {offsets = [0, 8], sizes = [8, 8], strides = [1, 1]} : vector<8x32xf32> to vector<8x8xf32>
    %c3_27 = arith.constant 3 : index
    %c1_28 = arith.constant 1 : index
    %68 = memref.load %arg7[%c3_27, %c1_28] : memref<4x4xf32, #tpu.memory_space<smem>>
    %69 = vector.broadcast %68 : f32 to vector<8x8xf32>
    %70 = arith.mulf %67, %69 : vector<8x8xf32>
    %71 = arith.addf %66, %70 : vector<8x8xf32>
    %72 = vector.extract_strided_slice %5 {offsets = [0, 16], sizes = [8, 8], strides = [1, 1]} : vector<8x32xf32> to vector<8x8xf32>
    %c3_29 = arith.constant 3 : index
    %c2_30 = arith.constant 2 : index
    %73 = memref.load %arg7[%c3_29, %c2_30] : memref<4x4xf32, #tpu.memory_space<smem>>
    %74 = vector.broadcast %73 : f32 to vector<8x8xf32>
    %75 = arith.mulf %72, %74 : vector<8x8xf32>
    %76 = arith.addf %71, %75 : vector<8x8xf32>
    %77 = vector.extract_strided_slice %5 {offsets = [0, 24], sizes = [8, 8], strides = [1, 1]} : vector<8x32xf32> to vector<8x8xf32>
    %c3_31 = arith.constant 3 : index
    %c3_32 = arith.constant 3 : index
    %78 = memref.load %arg7[%c3_31, %c3_32] : memref<4x4xf32, #tpu.memory_space<smem>>
    %79 = vector.broadcast %78 : f32 to vector<8x8xf32>
    %80 = arith.mulf %77, %79 : vector<8x8xf32>
    %81 = arith.addf %76, %80 : vector<8x8xf32>
    %82 = vector.shape_cast %24 : vector<8x8xf32> to vector<1x8x8xf32>
    %83 = vector.shape_cast %43 : vector<8x8xf32> to vector<1x8x8xf32>
    %84 = vector.shape_cast %62 : vector<8x8xf32> to vector<1x8x8xf32>
    %85 = vector.shape_cast %81 : vector<8x8xf32> to vector<1x8x8xf32>
    %86 = tpu.concatenate %82, %83, %84, %85 in 0 : vector<1x8x8xf32>, vector<1x8x8xf32>, vector<1x8x8xf32>, vector<1x8x8xf32> -> vector<4x8x8xf32>
    %c0_33 = arith.constant 0 : index
    %c0_34 = arith.constant 0 : index
    %c0_35 = arith.constant 0 : index
    %c0_36 = arith.constant 0 : index
    %87 = vector.load %arg8[%c0_33, %c0_34, %c0_35, %c0_36] : memref<1x4x8x8xf32, #tpu.memory_space<vmem>>, vector<1x4x8x8xf32>
    %88 = vector.shape_cast %87 : vector<1x4x8x8xf32> to vector<4x8x8xf32>
    %89 = vector.shape_cast %86 : vector<4x8x8xf32> to vector<1x4x8x8xf32>
    tpu.vector_store %arg8[%c0_33, %c0_34, %c0_35, %c0_36], %89 {strides = array<i32>} : memref<1x4x8x8xf32, #tpu.memory_space<vmem>>, vector<1x4x8x8xf32>,
    return
  }
  func.func @transform_0(%arg0: i32, %arg1: i32) -> (i32, i32, i32, i32) {
    %c0_i32 = arith.constant 0 : i32
    %c0_i32_0 = arith.constant 0 : i32
    %c0_i32_1 = arith.constant 0 : i32
    %c0_i32_2 = arith.constant 0 : i32
    return %arg0, %c0_i32, %c0_i32_0, %c0_i32_1 : i32, i32, i32, i32
  }
  func.func @transform_1(%arg0: i32, %arg1: i32) -> i32 {
    %c0_i32 = arith.constant 0 : i32
    %c0_i32_0 = arith.constant 0 : i32
    return %c0_i32 : i32
  }
  func.func @transform_2(%arg0: i32, %arg1: i32) -> i32 {
    %c0_i32 = arith.constant 0 : i32
    %c0_i32_0 = arith.constant 0 : i32
    return %c0_i32 : i32
  }
  func.func @transform_3(%arg0: i32, %arg1: i32) -> (i32, i32) {
    %c0_i32 = arith.constant 0 : i32
    %c0_i32_0 = arith.constant 0 : i32
    %c0_i32_1 = arith.constant 0 : i32
    return %c0_i32, %c0_i32_0 : i32, i32
  }
  func.func @transform_4(%arg0: i32, %arg1: i32) -> (i32, i32) {
    %c0_i32 = arith.constant 0 : i32
    %c0_i32_0 = arith.constant 0 : i32
    return %arg1, %c0_i32 : i32, i32
  }
  func.func @transform_5(%arg0: i32, %arg1: i32) -> (i32, i32) {
    %c0_i32 = arith.constant 0 : i32
    %c0_i32_0 = arith.constant 0 : i32
    %c0_i32_1 = arith.constant 0 : i32
    return %c0_i32, %c0_i32_0 : i32, i32
  }
  func.func @transform_6(%arg0: i32, %arg1: i32) -> (i32, i32, i32, i32) {
    %c0_i32 = arith.constant 0 : i32
    %c0_i32_0 = arith.constant 0 : i32
    %c0_i32_1 = arith.constant 0 : i32
    return %arg0, %c0_i32, %arg1, %c0_i32_0 : i32, i32, i32, i32
  }
}

</mosaic_0001>

<llo_original>
// kernel: tpu_custom_call.1
$region0: #{tpu_custom_call.1}
  #allocation0 [shape = 'u32[]', space=smem, size = 0x4, offset = 0x4, fixed_abs, tag = 'smem constant byte address 0x4 - core index']
  #allocation1 [shape = 'u32[72,128]{1,0:T(1,128)}', space=vmem, size = 0x9000, scoped, tag = 'internal scratch']
  #allocation2 [shape = 'bf16[16,32]{1,0:T(8,128)(2,1)}', space=vmem, size = 0x1000, scoped, tag = 'scratch operand']
  %s0 = inlined_call_operand.hbm [shape: f32[2,4,16,16], index: 0, kind: input, shape index: {}]
  %s1 = inlined_call_operand.vmem [shape: f32[4], index: 1, kind: input, shape index: {}]
  %s2 = inlined_call_operand.vmem [shape: f32[4], index: 2, kind: input, shape index: {}]
  %s3 = inlined_call_operand.vmem [shape: bf16[16,8], index: 3, kind: input, shape index: {}]
  %s4 = inlined_call_operand.vmem [shape: bf16[8,16], index: 4, kind: input, shape index: {}]
  %s5 = inlined_call_operand.vmem [shape: f32[4,4], index: 5, kind: input, shape index: {}]
  %s6 = inlined_call_operand.hbm [shape: f32[2,4,8,8], index: 6, kind: output, shape index: {}]
  %s7 = sld [smem:[#allocation0]]
  $region77: #{tpu_custom_call.1} parent=0
    _
  %s9 = ssub.s32 1, %s7
  %s10 = scalar_select 0, %s9, %s7
  $region1: #{tpu_custom_call.1} parent=0
    #allocation3 [shape = 'u8[65536]{0}', space=vmem, size = 0x10000, scoped, tag = 'input window, operand 0']
    #allocation4 [shape = 's32[2]{0}', space=sflag, size = 0x8, scoped, tag = 'scoped memory for tpu_custom_call.1']
    #allocation5 [shape = 's32[2]{0}', space=sflag, size = 0x8, scoped, tag = 'scoped memory for tpu_custom_call.1']
    #allocation6 [shape = 's32[2]{0}', space=sflag, size = 0x8, scoped, tag = 'scoped memory for tpu_custom_call.1']
    #allocation7 [shape = 'u8[512]{0}', space=smem, size = 0x200, scoped, tag = 'input window, operand 1, single buffered']
    #allocation8 [shape = 'u8[512]{0}', space=smem, size = 0x200, scoped, tag = 'input window, operand 2, single buffered']
    #allocation9 [shape = 's32[1]{0}', space=sflag, size = 0x4, scoped, tag = 'scoped memory for tpu_custom_call.1']
    #allocation10 [shape = 'u8[2048]{0}', space=smem, size = 0x800, scoped, tag = 'input window, operand 5, single buffered']
    #allocation11 [shape = 'u8[32768]{0}', space=vmem, size = 0x8000, scoped, tag = 'output window, operand 0']
    %11 = vsyncpa [#allocation4], 0
    %s12 = scalar_lea.sflag [#allocation4], 1
    %13 = vsyncpa %s12, 0
    %14 = vsyncpa [#allocation6], 0
    %15 = vsyncpa [#allocation9], 0
    %16 = vsyncpa [#allocation5], 0
    %s17 = scalar_lea.sflag [#allocation5], 1
    %18 = vsyncpa %s17, 0
    loop: start=0, step=1, limit=4
    $region2: #{tpu_custom_call.1} parent=1 // loop_pre_header
      _
    $region3: #{tpu_custom_call.1} parent=1 // loop_header
      %s20 = sphi 0, %s24
      %p21 = scmp.ge.s32.totalorder %s20, 4
      %s27 = sphi 0, %s39
      %s28 = sphi 0, %s35
      %s29 = sphi 0, %s27
      %s30 = sphi 0, %s28
      %s31 = sphi 0, %s29
      %s32 = sphi 0, %s30
      %s42 = sphi 0, %s44
      %s45 = sphi 0, %s42
      %s46 = sphi 0, %s45
      %s62 = sphi 0, %s46
      %s66 = sphi 0, %s66
      %s68 = sphi 0, %s66
      %s69 = sphi 0, %s68
      %s83 = sphi 0, %s69
      %s87 = sphi 0, %s87
      %s89 = sphi 0, %s87
      %s90 = sphi 0, %s89
      %s104 = sphi 0, %s90
      %s108 = sphi 0, %s108
      %s110 = sphi 0, %s108
      %s111 = sphi 0, %s110
      %s125 = sphi 0, %s111
      %s131 = sphi 0, %s133
      %s134 = sphi 0, %s131
      %s135 = sphi 0, %s134
      %s151 = sphi 0, %s135
      %s155 = sphi 0, %s155
      %s157 = sphi 0, %s155
      %s158 = sphi 0, %s157
      %s172 = sphi 0, %s158
      %s180 = sphi 0, %s182
      %s183 = sphi 0, %s180
      %s184 = sphi 0, %s183
      %s200 = sphi 0, %s184
    $region4: #{tpu_custom_call.1} parent=1 // loop_header_branch
      %23 = sbr.rel (%p21) target = $region8
    $region5: #{tpu_custom_call.1} parent=1 // loop_body
      %s25 = ssub.s32 %s20, 1
      %s26 = ssub.s32 %s20, 2
      %s33 = sadd.s32 1, %s28
      %p34 = scmp.ge.s32.totalorder %s33, 1
      %s35 = scalar_select %p34, 0, %s33
      %s36 = sadd.s32 1, %s27
      %s37 = scalar_select %p34, %s36, %s27
      %p38 = scmp.ge.s32.totalorder %s37, 2
      %s39 = scalar_select %p38, 0, %s37
      %s40 = ssub.s32 %s27, %s39
      %p41 = scmp.eq.s32.totalorder %s40, 0
      %s43 = sadd.s32 %s42, 1
      %s44 = scalar_select %p41, %s42, %s43
      %p47 = pneg %p41
      %p48 = scmp.eq.s32.totalorder %s20, 1
      %p49 = por %p47, %p48
      %p50 = scmp.ne.s32.totalorder %s42, %s45
      %p51 = scmp.eq.s32.totalorder %s20, 0
      %p52 = por %p50, %p51
      %p53 = scmp.ne.s32.totalorder %s42, %s45
      %p54 = scmp.eq.s32.totalorder %s25, 1
      %p55 = por %p53, %p54
      %p56 = scmp.ne.s32.totalorder %s45, %s46
      %p57 = scmp.eq.s32.totalorder %s25, 0
      %p58 = por %p56, %p57
      %p59 = scmp.ne.s32.totalorder %s45, %s46
      %p60 = scmp.eq.s32.totalorder %s26, 1
      %p61 = por %p59, %p60
      %p63 = scmp.ne.s32.totalorder %s46, %s62
      %p64 = scmp.eq.s32.totalorder %s26, 0
      %p65 = por %p63, %p64
      %s67 = sadd.s32 %s66, 1
      %p70 = scmp.eq.s32.totalorder %s20, 1
      %p71 = scmp.ne.s32.totalorder %s66, %s68
      %p72 = scmp.eq.s32.totalorder %s20, 0
      %p73 = por %p71, %p72
      %p74 = scmp.ne.s32.totalorder %s66, %s68
      %p75 = scmp.eq.s32.totalorder %s25, 1
      %p76 = por %p74, %p75
      %p77 = scmp.ne.s32.totalorder %s68, %s69
      %p78 = scmp.eq.s32.totalorder %s25, 0
      %p79 = por %p77, %p78
      %p80 = scmp.ne.s32.totalorder %s68, %s69
      %p81 = scmp.eq.s32.totalorder %s26, 1
      %p82 = por %p80, %p81
      %p84 = scmp.ne.s32.totalorder %s69, %s83
      %p85 = scmp.eq.s32.totalorder %s26, 0
      %p86 = por %p84, %p85
      %s88 = sadd.s32 %s87, 1
      %p91 = scmp.eq.s32.totalorder %s20, 1
      %p92 = scmp.ne.s32.totalorder %s87, %s89
      %p93 = scmp.eq.s32.totalorder %s20, 0
      %p94 = por %p92, %p93
      %p95 = scmp.ne.s32.totalorder %s87, %s89
      %p96 = scmp.eq.s32.totalorder %s25, 1
      %p97 = por %p95, %p96
      %p98 = scmp.ne.s32.totalorder %s89, %s90
      %p99 = scmp.eq.s32.totalorder %s25, 0
      %p100 = por %p98, %p99
      %p101 = scmp.ne.s32.totalorder %s89, %s90
      %p102 = scmp.eq.s32.totalorder %s26, 1
      %p103 = por %p101, %p102
      %p105 = scmp.ne.s32.totalorder %s90, %s104
      %p106 = scmp.eq.s32.totalorder %s26, 0
      %p107 = por %p105, %p106
      %s109 = sadd.s32 %s108, 1
      %p112 = scmp.eq.s32.totalorder %s20, 1
      %p113 = scmp.ne.s32.totalorder %s108, %s110
      %p114 = scmp.eq.s32.totalorder %s20, 0
      %p115 = por %p113, %p114
      %p116 = scmp.ne.s32.totalorder %s108, %s110
      %p117 = scmp.eq.s32.totalorder %s25, 1
      %p118 = por %p116, %p117
      %p119 = scmp.ne.s32.totalorder %s110, %s111
      %p120 = scmp.eq.s32.totalorder %s25, 0
      %p121 = por %p119, %p120
      %p122 = scmp.ne.s32.totalorder %s110, %s111
      %p123 = scmp.eq.s32.totalorder %s26, 1
      %p124 = por %p122, %p123
      %p126 = scmp.ne.s32.totalorder %s111, %s125
      %p127 = scmp.eq.s32.totalorder %s26, 0
      %p128 = por %p126, %p127
      %s129 = ssub.s32 %s28, %s35
      %p130 = scmp.eq.s32.totalorder %s129, 0
      %s132 = sadd.s32 %s131, 1
      %s133 = scalar_select %p130, %s131, %s132
      %p136 = pneg %p130
      %p137 = scmp.eq.s32.totalorder %s20, 1
      %p138 = por %p136, %p137
      %p139 = scmp.ne.s32.totalorder %s131, %s134
      %p140 = scmp.eq.s32.totalorder %s20, 0
      %p141 = por %p139, %p140
      %p142 = scmp.ne.s32.totalorder %s131, %s134
      %p143 = scmp.eq.s32.totalorder %s25, 1
      %p144 = por %p142, %p143
      %p145 = scmp.ne.s32.totalorder %s134, %s135
      %p146 = scmp.eq.s32.totalorder %s25, 0
      %p147 = por %p145, %p146
      %p148 = scmp.ne.s32.totalorder %s134, %s135
      %p149 = scmp.eq.s32.totalorder %s26, 1
      %p150 = por %p148, %p149
      %p152 = scmp.ne.s32.totalorder %s135, %s151
      %p153 = scmp.eq.s32.totalorder %s26, 0
      %p154 = por %p152, %p153
      %s156 = sadd.s32 %s155, 1
      %p159 = scmp.eq.s32.totalorder %s20, 1
      %p160 = scmp.ne.s32.totalorder %s155, %s157
      %p161 = scmp.eq.s32.totalorder %s20, 0
      %p162 = por %p160, %p161
      %p163 = scmp.ne.s32.totalorder %s155, %s157
      %p164 = scmp.eq.s32.totalorder %s25, 1
      %p165 = por %p163, %p164
      %p166 = scmp.ne.s32.totalorder %s157, %s158
      %p167 = scmp.eq.s32.totalorder %s25, 0
      %p168 = por %p166, %p167
      %p169 = scmp.ne.s32.totalorder %s157, %s158
      %p170 = scmp.eq.s32.totalorder %s26, 1
      %p171 = por %p169, %p170
      %p173 = scmp.ne.s32.totalorder %s158, %s172
      %p174 = scmp.eq.s32.totalorder %s26, 0
      %p175 = por %p173, %p174
      %s176 = ssub.s32 %s27, %s39
      %s177 = ssub.s32 %s28, %s35
      %s178 = sor.u32 %s176, %s177
      %p179 = scmp.eq.s32.totalorder %s178, 0
      %s181 = sadd.s32 %s180, 1
      %s182 = scalar_select %p179, %s180, %s181
      %p185 = pneg %p179
      %p186 = scmp.eq.s32.totalorder %s20, 1
      %p187 = por %p185, %p186
      %p188 = scmp.ne.s32.totalorder %s180, %s183
      %p189 = scmp.eq.s32.totalorder %s20, 0
      %p190 = por %p188, %p189
      %p191 = scmp.ne.s32.totalorder %s180, %s183
      %p192 = scmp.eq.s32.totalorder %s25, 1
      %p193 = por %p191, %p192
      %p194 = scmp.ne.s32.totalorder %s183, %s184
      %p195 = scmp.eq.s32.totalorder %s25, 0
      %p196 = por %p194, %p195
      %p197 = scmp.ne.s32.totalorder %s183, %s184
      %p198 = scmp.eq.s32.totalorder %s26, 1
      %p199 = por %p197, %p198
      %p201 = scmp.ne.s32.totalorder %s184, %s200
      %p202 = scmp.eq.s32.totalorder %s26, 0
      %p203 = por %p201, %p202
      %p204 = scmp.le.s32.totalorder 1, %s20
      %p205 = scmp.lt.s32.totalorder %s20, 3
      %p206 = pnand %p204, %p205
      %p207 = pneg %p206
      // Predicated region
      $region9: #{tpu_custom_call.1} parent=5 // pred_check
        _
      $region10: #{tpu_custom_call.1} parent=5 // pred_check_branch
        %209 = sbr.rel (%p206) target = $region12
      $region11: #{tpu_custom_call.1} parent=5 // pred_region
        %s210 = ssub.s32 %s20, 1
        // Predicated region
        $region13: #{tpu_custom_call.1} parent=11 // pred_check
          %p211 = pneg %p79
        $region14: #{tpu_custom_call.1} parent=11 // pred_check_branch
          %213 = sbr.rel (%p211) target = $region16
        $region15: #{tpu_custom_call.1} parent=11 // pred_region
          %215 = vsyncadd [#allocation6], 0
          %s217 = sshll.u32 %s1, 4
          %s218 = int_to_ptr.vmem [resolvable:$true] %s217
          %220 = dma.vmem_to_smem %s218, 16, [#allocation7], [#allocation6]
        $region16: #{tpu_custom_call.1} parent=11 // pred_fallthru
          _
        // Predicated region
        $region17: #{tpu_custom_call.1} parent=11 // pred_check
          %p221 = pneg %p100
        $region18: #{tpu_custom_call.1} parent=11 // pred_check_branch
          %223 = sbr.rel (%p221) target = $region20
        $region19: #{tpu_custom_call.1} parent=11 // pred_region
          %225 = vsyncadd [#allocation9], 0
          %s227 = sshll.u32 %s2, 4
          %s228 = int_to_ptr.vmem [resolvable:$true] %s227
          %230 = dma.vmem_to_smem %s228, 16, [#allocation8], [#allocation9]
        $region20: #{tpu_custom_call.1} parent=11 // pred_fallthru
          _
        // Predicated region
        $region21: #{tpu_custom_call.1} parent=11 // pred_check
          %p231 = pneg %p121
        $region22: #{tpu_custom_call.1} parent=11 // pred_check_branch
          %233 = sbr.rel (%p231) target = $region24
        $region23: #{tpu_custom_call.1} parent=11 // pred_region
          _
        $region24: #{tpu_custom_call.1} parent=11 // pred_fallthru
          _
        // Predicated region
        $region25: #{tpu_custom_call.1} parent=11 // pred_check
          %p234 = pneg %p147
        $region26: #{tpu_custom_call.1} parent=11 // pred_check_branch
          %236 = sbr.rel (%p234) target = $region28
        $region27: #{tpu_custom_call.1} parent=11 // pred_region
          %p237 = scmp.lt.s32.totalorder %s30, 0
          %s238 = scalar_select %p237, %s30, 0
          %s239 = smul.addr %s238, 4
          %s240 = scalar_lea.vmem %s4, %s239
        $region28: #{tpu_custom_call.1} parent=11 // pred_fallthru
          _
        // Predicated region
        $region29: #{tpu_custom_call.1} parent=11 // pred_check
          %p241 = pneg %p168
        $region30: #{tpu_custom_call.1} parent=11 // pred_check_branch
          %243 = sbr.rel (%p241) target = $region32
        $region31: #{tpu_custom_call.1} parent=11 // pred_region
          %245 = vsyncadd [#allocation9], 0
          %s247 = sshll.u32 %s5, 4
          %s248 = int_to_ptr.vmem [resolvable:$true] %s247
          %250 = dma.vmem_to_smem %s248, 64, [#allocation10], [#allocation9]
        $region32: #{tpu_custom_call.1} parent=11 // pred_fallthru
          _
      $region12: #{tpu_custom_call.1} parent=5 // pred_fallthru
        _
      %p251 = scmp.lt.s32.totalorder %s20, 2
      // Predicated region
      $region33: #{tpu_custom_call.1} parent=5 // pred_check
        %p252 = pneg %p251
      $region34: #{tpu_custom_call.1} parent=5 // pred_check_branch
        %254 = sbr.rel (%p252) target = $region36
      $region35: #{tpu_custom_call.1} parent=5 // pred_region
        // Predicated region
        $region37: #{tpu_custom_call.1} parent=35 // pred_check
          %p255 = pneg %p52
        $region38: #{tpu_custom_call.1} parent=35 // pred_check_branch
          %257 = sbr.rel (%p255) target = $region40
        $region39: #{tpu_custom_call.1} parent=35 // pred_region
          %s258 = sand.u32 %s42, 1
          %s259 = scalar_lea.sflag [#allocation4], %s258
          %s260 = sand.u32 %s42, 1
          %s261 = smul.addr %s260, 64
          %s262 = scalar_lea.vmem [#allocation3], %s261
          %264 = vsyncadd %s259, 0
          %s265 = smul.addr %s27, 8
          %s266 = smul.addr %s265, 8
          %s267 = scalar_lea.hbm %s0, %s266
          %s268 = sshll.u32 %s267, 4
          %s269 = int_to_ptr.hbm [resolvable:$true] %s268
          %s270 = sshll.u32 %s262, 4
          %s271 = int_to_ptr.vmem [resolvable:$true] %s270
          %276 = dma.hbm_to_vmem [thread:$0]  %s269, 1024, %s271, %s259, 128, 128, 8
        $region40: #{tpu_custom_call.1} parent=35 // pred_fallthru
          _
      $region36: #{tpu_custom_call.1} parent=5 // pred_fallthru
        _
      %p277 = scmp.le.s32.totalorder 1, %s20
      %p278 = scmp.lt.s32.totalorder %s20, 3
      %p279 = pnand %p277, %p278
      %p280 = pneg %p279
      // Predicated region
      $region41: #{tpu_custom_call.1} parent=5 // pred_check
        _
      $region42: #{tpu_custom_call.1} parent=5 // pred_check_branch
        %282 = sbr.rel (%p279) target = $region44
      $region43: #{tpu_custom_call.1} parent=5 // pred_region
        %s283 = ssub.s32 %s20, 1
        %s284 = sand.u32 %s45, 1
        %s285 = scalar_lea.sflag [#allocation4], %s284
        %s286 = sand.u32 %s45, 1
        %s287 = smul.addr %s286, 64
        %s288 = scalar_lea.vmem [#allocation3], %s287
        // Predicated region
        $region45: #{tpu_custom_call.1} parent=43 // pred_check
          %p289 = pneg %p58
        $region46: #{tpu_custom_call.1} parent=43 // pred_check_branch
          %291 = sbr.rel (%p289) target = $region48
        $region47: #{tpu_custom_call.1} parent=43 // pred_region
          %293 = dma.done %s285, 1024
        $region48: #{tpu_custom_call.1} parent=43 // pred_fallthru
          _
        // Predicated region
        $region49: #{tpu_custom_call.1} parent=43 // pred_check
          %p294 = pneg %p79
        $region50: #{tpu_custom_call.1} parent=43 // pred_check_branch
          %296 = sbr.rel (%p294) target = $region52
        $region51: #{tpu_custom_call.1} parent=43 // pred_region
          %298 = dma.done [#allocation6], 16
        $region52: #{tpu_custom_call.1} parent=43 // pred_fallthru
          _
        // Predicated region
        $region53: #{tpu_custom_call.1} parent=43 // pred_check
          %p299 = pneg %p100
        $region54: #{tpu_custom_call.1} parent=43 // pred_check_branch
          %301 = sbr.rel (%p299) target = $region56
        $region55: #{tpu_custom_call.1} parent=43 // pred_region
          %303 = dma.done [#allocation9], 16
        $region56: #{tpu_custom_call.1} parent=43 // pred_fallthru
          _
        // Predicated region
        $region57: #{tpu_custom_call.1} parent=43 // pred_check
          %p304 = pneg %p168
        $region58: #{tpu_custom_call.1} parent=43 // pred_check_branch
          %306 = sbr.rel (%p304) target = $region60
        $region59: #{tpu_custom_call.1} parent=43 // pred_region
          %308 = dma.done [#allocation9], 64
        $region60: #{tpu_custom_call.1} parent=43 // pred_fallthru
          _
        %309 = sfence
        %s310 = sand.u32 %s45, 1
        %s311 = scalar_lea.sflag [#allocation4], %s310
        %s312 = sand.u32 %s45, 1
        %s313 = smul.addr %s312, 64
        %s314 = scalar_lea.vmem [#allocation3], %s313
        %p315 = pneg %p58
        %p316 = pneg %p55
        %p317 = pneg %p79
        %p318 = pneg %p76
        %p319 = pneg %p100
        %p320 = pneg %p97
        %p321 = pneg %p121
        %p322 = pneg %p118
        %p323 = scmp.lt.s32.totalorder %s30, 0
        %s324 = scalar_select %p323, %s30, 0
        %s325 = smul.addr %s324, 4
        %s326 = scalar_lea.vmem %s4, %s325
        %p327 = pneg %p147
        %p328 = pneg %p144
        %p329 = pneg %p168
        %p330 = pneg %p165
        %p331 = pneg %p196
        %p332 = pneg %p193
        %s333 = sand.u32 %s183, 1
        %s334 = scalar_lea.sflag [#allocation5], %s333
        %s335 = sand.u32 %s183, 1
        %s336 = smul.addr %s335, 32
        %s337 = scalar_lea.vmem [#allocation11], %s336
        %p338 = scmp.lt.s32.totalorder %s30, 0
        %s339 = scalar_select %p338, %s30, 0
        %s340 = smul.addr %s339, 4
        %s341 = scalar_lea.vmem %s4, %s340
        %p343 = scmp.eq.s32.totalorder %s30, 0
        // Predicated region
        $region61: #{tpu_custom_call.1} parent=43 // pred_check
          %p344 = pneg %p343
        $region62: #{tpu_custom_call.1} parent=43 // pred_check_branch
          %346 = sbr.rel (%p344) target = $region64
        $region63: #{tpu_custom_call.1} parent=43 // pred_region
          %v347 = vld [vmem:[%s288] sm:$0xff]
          %v348 = vld [vmem:[%s288 + $0x8] sm:$0xff]
          %v349 = vld [vmem:[%s288 + $0x10] sm:$0xff]
          %v350 = vld [vmem:[%s288 + $0x18] sm:$0xff]
          %v351 = vld [vmem:[%s288 + $0x20] sm:$0xff]
          %v352 = vld [vmem:[%s288 + $0x28] sm:$0xff]
          %v353 = vld [vmem:[%s288 + $0x30] sm:$0xff]
          %v354 = vld [vmem:[%s288 + $0x38] sm:$0xff]
          %v355 = vadd.f32 %v347, %v349
          %v356 = vadd.f32 %v348, %v350
          %v357 = vadd.f32 %v355, %v351
          %v358 = vadd.f32 %v356, %v352
          %v359 = vadd.f32 %v357, %v353
          %v360 = vadd.f32 %v358, %v354
          %v361 = vmul.f32 %v359, 0.25
          %v362 = vmul.f32 %v360, 0.25
          %v363 = vsub.f32 %v347, %v361
          %v364 = vsub.f32 %v348, %v362
          %v365 = vmul.f32 %v363, %v363
          %v366 = vmul.f32 %v364, %v364
          %v367 = vsub.f32 %v349, %v361
          %v368 = vsub.f32 %v350, %v362
          %v369 = vmul.f32 %v367, %v367
          %v370 = vmul.f32 %v368, %v368
          %v371 = vadd.f32 %v365, %v369
          %v372 = vadd.f32 %v366, %v370
          %v373 = vsub.f32 %v351, %v361
          %v374 = vsub.f32 %v352, %v362
          %v375 = vmul.f32 %v373, %v373
          %v376 = vmul.f32 %v374, %v374
          %v377 = vadd.f32 %v371, %v375
          %v378 = vadd.f32 %v372, %v376
          %v379 = vsub.f32 %v353, %v361
          %v380 = vsub.f32 %v354, %v362
          %v381 = vmul.f32 %v379, %v379
          %v382 = vmul.f32 %v380, %v380
          %v383 = vadd.f32 %v377, %v381
          %v384 = vadd.f32 %v378, %v382
          %v385 = vmul.f32 %v383, 0.25
          %v386 = vmul.f32 %v384, 0.25
          %v387 = vadd.f32 %v385, 1e-05
          %v388 = vadd.f32 %v386, 1e-05
          %v389 = vrsqrt.pop %v387
          %v390 = vmul.f32 %v389, %v387
          %v391 = vmul.f32 %v390, %v389
          %v392 = vmul.f32 0.5, %v391
          %v393 = vsub.f32 1.5, %v392
          %v394 = vmul.f32 %v389, %v393
          %vm395 = vweird.f32 %v387
          %vm396 = vweird.f32 %v389
          %vm397 = vmor %vm395, %vm396
          %v398 = vsel %vm397, %v389, %v394
          %v399 = vrsqrt.pop %v388
          %v400 = vmul.f32 %v399, %v388
          %v401 = vmul.f32 %v400, %v399
          %v402 = vmul.f32 0.5, %v401
          %v403 = vsub.f32 1.5, %v402
          %v404 = vmul.f32 %v399, %v403
          %vm405 = vweird.f32 %v388
          %vm406 = vweird.f32 %v399
          %vm407 = vmor %vm405, %vm406
          %v408 = vsel %vm407, %v399, %v404
          %v409 = vmul.f32 %v363, %v398
          %v410 = vmul.f32 %v364, %v408
          %s411 = sld [smem:[#allocation7]]
          %v412 = vstv %s411
          %v413 = vmul.f32 %v409, %v412
          %v414 = vmul.f32 %v410, %v412
          %s415 = sld [smem:[#allocation8]]
          %v416 = vstv %s415
          %v417 = vadd.f32 %v413, %v416
          %v418 = vadd.f32 %v414, %v416
          %v419 = vpack.c.bf16 %v417, %v417
          %v420 = vpack.c.bf16 %v418, %v418
          %v421 = vunpack.c.l.bf16 %v419
          %v422 = vunpack.c.l.bf16 %v420
          %v423 = vtanh.pop %v421
          %v424 = vtanh.pop %v422
          %v425 = vpack.c.bf16 %v423, %v423
          %v426 = vpack.c.bf16 %v424, %v424
          %v427 = vmul.f32 %v367, %v398
          %v428 = vmul.f32 %v368, %v408
          %s429 = sld [smem:[#allocation7 + $0x1]]
          %v430 = vstv %s429
          %v431 = vmul.f32 %v427, %v430
          %v432 = vmul.f32 %v428, %v430
          %s433 = sld [smem:[#allocation8 + $0x1]]
          %v434 = vstv %s433
          %v435 = vadd.f32 %v431, %v434
          %v436 = vadd.f32 %v432, %v434
          %v437 = vpack.c.bf16 %v435, %v435
          %v438 = vpack.c.bf16 %v436, %v436
          %v439 = vunpack.c.l.bf16 %v437
          %v440 = vunpack.c.l.bf16 %v438
          %v441 = vtanh.pop %v439
          %v442 = vtanh.pop %v440
          %v443 = vpack.c.bf16 %v441, %v441
          %v444 = vpack.c.bf16 %v442, %v442
          %v445 = vmul.f32 %v373, %v398
          %v446 = vmul.f32 %v374, %v408
          %s447 = sld [smem:[#allocation7 + $0x2]]
          %v448 = vstv %s447
          %v449 = vmul.f32 %v445, %v448
          %v450 = vmul.f32 %v446, %v448
          %s451 = sld [smem:[#allocation8 + $0x2]]
          %v452 = vstv %s451
          %v453 = vadd.f32 %v449, %v452
          %v454 = vadd.f32 %v450, %v452
          %v455 = vpack.c.bf16 %v453, %v453
          %v456 = vpack.c.bf16 %v454, %v454
          %v457 = vunpack.c.l.bf16 %v455
          %v458 = vunpack.c.l.bf16 %v456
          %v459 = vtanh.pop %v457
          %v460 = vtanh.pop %v458
          %v461 = vpack.c.bf16 %v459, %v459
          %v462 = vpack.c.bf16 %v460, %v460
          %v463 = vmul.f32 %v379, %v398
          %v464 = vmul.f32 %v380, %v408
          %s465 = sld [smem:[#allocation7 + $0x3]]
          %v466 = vstv %s465
          %v467 = vmul.f32 %v463, %v466
          %v468 = vmul.f32 %v464, %v466
          %s469 = sld [smem:[#allocation8 + $0x3]]
          %v470 = vstv %s469
          %v471 = vadd.f32 %v467, %v470
          %v472 = vadd.f32 %v468, %v470
          %v473 = vpack.c.bf16 %v471, %v471
          %v474 = vpack.c.bf16 %v472, %v472
          %v475 = vunpack.c.l.bf16 %v473
          %v476 = vunpack.c.l.bf16 %v474
          %v477 = vtanh.pop %v475
          %v478 = vtanh.pop %v476
          %v479 = vpack.c.bf16 %v477, %v477
          %v480 = vpack.c.bf16 %v478, %v478
          %v483 = vunpack.c.l.b16 %v425
          %v484 = vunpack.c.l.b16 %v426
          %v485 = vpack.c.b16 %v484, %v483
          %v488 = vunpack.c.l.b16 %v443
          %v489 = vunpack.c.l.b16 %v444
          %v490 = vpack.c.b16 %v489, %v488
          %v493 = vunpack.c.l.b16 %v461
          %v494 = vunpack.c.l.b16 %v462
          %v495 = vpack.c.b16 %v494, %v493
          %v498 = vunpack.c.l.b16 %v479
          %v499 = vunpack.c.l.b16 %v480
          %v500 = vpack.c.b16 %v499, %v498
          %v501 = vld [vmem:[%s3] sm:$0xf]
          %v502 = vld [vmem:[%s3 + $0x4] sm:$0xf]
          %v505 = vunpack.c.l.b16 %v501
          %v506 = vunpack.c.l.b16 %v502
          %v507 = vpack.c.b16 %v506, %v505
          %vm509 = vcmask 130048
          %v511 = vsel %vm509, %v485, 0
          %v514 = vsel %vm509, %v490, 0
          %v517 = vsel %vm509, %v495, 0
          %v520 = vsel %vm509, %v500, 0
          %522 = vmatpush.bf16.msra.mxu0 0
          %523 = vmatpush.bf16.msra.mxu0 0
          %524 = vmatpush.bf16.msra.mxu0 0
          %525 = vmatpush.bf16.msra.mxu0 0
          %526 = vmatpush.bf16.msra.mxu0 0
          %527 = vmatpush.bf16.msra.mxu0 0
          %528 = vmatpush.bf16.msra.mxu0 0
          %529 = vmatpush.bf16.msra.mxu0 %v507
          %530 = vmatmul.bf16.gmra.mxu0 %v511
          %v531 = vpop.f32.mrf.mxu0
          %v532 = vadd.f32 0.0, %v531
          %v533 = vpop.f32.mrf.mxu0
          %v534 = vadd.f32 0.0, %v533
          %535 = vmatmul.bf16.gmra.mxu0 %v514
          %v536 = vpop.f32.mrf.mxu0
          %v537 = vadd.f32 0.0, %v536
          %v538 = vpop.f32.mrf.mxu0
          %v539 = vadd.f32 0.0, %v538
          %540 = vmatmul.bf16.gmra.mxu0 %v517
          %v541 = vpop.f32.mrf.mxu0
          %v542 = vadd.f32 0.0, %v541
          %v543 = vpop.f32.mrf.mxu0
          %v544 = vadd.f32 0.0, %v543
          %545 = vmatmul.bf16.gmra.mxu0 %v520
          %v546 = vpop.f32.mrf.mxu0
          %v547 = vadd.f32 0.0, %v546
          %v548 = vpop.f32.mrf.mxu0
          %v549 = vadd.f32 0.0, %v548
          %550 = vdwg.mxu0
          %553 = vrot.lane.b32.xlu0 %v537, 8
          %v554 = vpop.permute.xlu0 %553
          %555 = vrot.lane.b32.xlu0 %v539, 8
          %v556 = vpop.permute.xlu0 %555
          %561 = vrot.lane.b32.xlu0 %v542, 16
          %v562 = vpop.permute.xlu0 %561
          %563 = vrot.lane.b32.xlu0 %v544, 16
          %v564 = vpop.permute.xlu0 %563
          %569 = vrot.lane.b32.xlu0 %v547, 24
          %v570 = vpop.permute.xlu0 %569
          %571 = vrot.lane.b32.xlu0 %v549, 24
          %v572 = vpop.permute.xlu0 %571
          %vm575 = vcmask 64512
          %v576 = vsel %vm575, %v532, %v554
          %v577 = vsel %vm575, %v534, %v556
          %v578 = vsel %vm509, %v576, %v562
          %v579 = vsel %vm509, %v577, %v564
          %vm580 = vcmask 195584
          %v581 = vsel %vm580, %v578, %v570
          %v582 = vsel %vm580, %v579, %v572
          %v583 = vpack.c.bf16 %v581, %v581
          %v584 = vpack.c.bf16 %v582, %v582
          %vm585 = vcmask 257024
          %586 = vst.msk [vmem:[#allocation2] sm:$0xf] %vm585, %v583
          %587 = vst.msk [vmem:[#allocation2 + $0x4] sm:$0xf] %vm585, %v584
        $region64: #{tpu_custom_call.1} parent=43 // pred_fallthru
          _
        %v588 = vld [vmem:[%s341] sm:$0xf]
        %v589 = vld [vmem:[#allocation2] sm:$0xf]
        %v590 = vld [vmem:[#allocation2 + $0x4] sm:$0xf]
        %v593 = vunpack.c.l.b16 %v589
        %v594 = vunpack.c.l.b16 %v590
        %v595 = vpack.c.b16 %v594, %v593
        %vm597 = vcmask 130048
        %v599 = vsel %vm597, %v588, 0
        %601 = vmatpush.bf16.msra.mxu0 0
        %602 = vmatpush.bf16.msra.mxu0 0
        %603 = vmatpush.bf16.msra.mxu0 0
        %604 = vmatpush.bf16.msra.mxu0 0
        %605 = vmatpush.bf16.msra.mxu0 0
        %606 = vmatpush.bf16.msra.mxu0 0
        %607 = vmatpush.bf16.msra.mxu0 0
        %608 = vmatpush.bf16.msra.mxu0 %v595
        %609 = vmatmul.bf16.gmra.mxu0 %v599
        %v610 = vpop.f32.mrf.mxu0
        %v611 = vadd.f32 0.0, %v610
        %v612 = vpop.f32.mrf.mxu0
        %613 = vdwg.mxu0
        %s614 = sld [smem:[#allocation10]]
        %v615 = vstv %s614
        %v616 = vmul.f32 %v611, %v615
        %s617 = sld [smem:[#allocation10 + $0x1]]
        %v618 = vstv %s617
        %v619 = vmul.f32 %v611, %v618
        %621 = vrot.lane.b32.xlu0 %v619, 120
        %v622 = vpop.permute.xlu0 %621
        %v624 = vadd.f32 %v616, %v622
        %s625 = sld [smem:[#allocation10 + $0x2]]
        %v626 = vstv %s625
        %v627 = vmul.f32 %v611, %v626
        %629 = vrot.lane.b32.xlu0 %v627, 112
        %v630 = vpop.permute.xlu0 %629
        %v632 = vadd.f32 %v624, %v630
        %s633 = sld [smem:[#allocation10 + $0x3]]
        %v634 = vstv %s633
        %v635 = vmul.f32 %v611, %v634
        %637 = vrot.lane.b32.xlu0 %v635, 104
        %v638 = vpop.permute.xlu0 %637
        %v640 = vadd.f32 %v632, %v638
        %s641 = sld [smem:[#allocation10 + $0x80]]
        %v642 = vstv %s641
        %v643 = vmul.f32 %v611, %v642
        %s644 = sld [smem:[#allocation10 + $0x81]]
        %v645 = vstv %s644
        %v646 = vmul.f32 %v611, %v645
        %648 = vrot.lane.b32.xlu0 %v646, 120
        %v649 = vpop.permute.xlu0 %648
        %v651 = vadd.f32 %v643, %v649
        %s652 = sld [smem:[#allocation10 + $0x82]]
        %v653 = vstv %s652
        %v654 = vmul.f32 %v611, %v653
        %656 = vrot.lane.b32.xlu0 %v654, 112
        %v657 = vpop.permute.xlu0 %656
        %v659 = vadd.f32 %v651, %v657
        %s660 = sld [smem:[#allocation10 + $0x83]]
        %v661 = vstv %s660
        %v662 = vmul.f32 %v611, %v661
        %664 = vrot.lane.b32.xlu0 %v662, 104
        %v665 = vpop.permute.xlu0 %664
        %v667 = vadd.f32 %v659, %v665
        %s668 = sld [smem:[#allocation10 + $0x100]]
        %v669 = vstv %s668
        %v670 = vmul.f32 %v611, %v669
        %s671 = sld [smem:[#allocation10 + $0x101]]
        %v672 = vstv %s671
        %v673 = vmul.f32 %v611, %v672
        %675 = vrot.lane.b32.xlu0 %v673, 120
        %v676 = vpop.permute.xlu0 %675
        %v678 = vadd.f32 %v670, %v676
        %s679 = sld [smem:[#allocation10 + $0x102]]
        %v680 = vstv %s679
        %v681 = vmul.f32 %v611, %v680
        %683 = vrot.lane.b32.xlu0 %v681, 112
        %v684 = vpop.permute.xlu0 %683
        %v686 = vadd.f32 %v678, %v684
        %s687 = sld [smem:[#allocation10 + $0x103]]
        %v688 = vstv %s687
        %v689 = vmul.f32 %v611, %v688
        %691 = vrot.lane.b32.xlu0 %v689, 104
        %v692 = vpop.permute.xlu0 %691
        %v694 = vadd.f32 %v686, %v692
        %s695 = sld [smem:[#allocation10 + $0x180]]
        %v696 = vstv %s695
        %v697 = vmul.f32 %v611, %v696
        %s698 = sld [smem:[#allocation10 + $0x181]]
        %v699 = vstv %s698
        %v700 = vmul.f32 %v611, %v699
        %702 = vrot.lane.b32.xlu0 %v700, 120
        %v703 = vpop.permute.xlu0 %702
        %v705 = vadd.f32 %v697, %v703
        %s706 = sld [smem:[#allocation10 + $0x182]]
        %v707 = vstv %s706
        %v708 = vmul.f32 %v611, %v707
        %710 = vrot.lane.b32.xlu0 %v708, 112
        %v711 = vpop.permute.xlu0 %710
        %v713 = vadd.f32 %v705, %v711
        %s714 = sld [smem:[#allocation10 + $0x183]]
        %v715 = vstv %s714
        %v716 = vmul.f32 %v611, %v715
        %718 = vrot.lane.b32.xlu0 %v716, 104
        %v719 = vpop.permute.xlu0 %718
        %v721 = vadd.f32 %v713, %v719
        %vm722 = vcmask 64512
        %723 = vst.msk [vmem:[%s337] sm:$0xff] %vm722, %v640
        %724 = vst.msk [vmem:[%s337 + $0x8] sm:$0xff] %vm722, %v667
        %725 = vst.msk [vmem:[%s337 + $0x10] sm:$0xff] %vm722, %v694
        %726 = vst.msk [vmem:[%s337 + $0x18] sm:$0xff] %vm722, %v721
        %s727 = sand.u32 %s183, 1
        %s728 = scalar_lea.sflag [#allocation5], %s727
        %s729 = sand.u32 %s183, 1
        %s730 = smul.addr %s729, 32
        %s731 = scalar_lea.vmem [#allocation11], %s730
        // Predicated region
        $region65: #{tpu_custom_call.1} parent=43 // pred_check
          %p732 = pneg %p193
        $region66: #{tpu_custom_call.1} parent=43 // pred_check_branch
          %734 = sbr.rel (%p732) target = $region68
        $region67: #{tpu_custom_call.1} parent=43 // pred_region
          %736 = vsyncadd %s728, 0
          %s737 = smul.addr %s29, 4
          %s738 = sadd.s32 %s30, %s737
          %s739 = smul.addr %s738, 8
          %s740 = scalar_lea.hbm %s6, %s739
          %s741 = sshll.u32 %s731, 4
          %s742 = int_to_ptr.vmem [resolvable:$true] %s741
          %s743 = sshll.u32 %s740, 4
          %s744 = int_to_ptr.hbm [resolvable:$true] %s743
          %749 = dma.vmem_to_hbm [thread:$0]  %s742, 512, %s744, %s728, 128, 128, 8
        $region68: #{tpu_custom_call.1} parent=43 // pred_fallthru
          _
      $region44: #{tpu_custom_call.1} parent=5 // pred_fallthru
        _
      %p750 = scmp.le.s32.totalorder 2, %s20
      // Predicated region
      $region69: #{tpu_custom_call.1} parent=5 // pred_check
        %p751 = pneg %p750
      $region70: #{tpu_custom_call.1} parent=5 // pred_check_branch
        %753 = sbr.rel (%p751) target = $region72
      $region71: #{tpu_custom_call.1} parent=5 // pred_region
        %s754 = ssub.s32 %s20, 2
        // Predicated region
        $region73: #{tpu_custom_call.1} parent=71 // pred_check
          %p755 = pneg %p199
        $region74: #{tpu_custom_call.1} parent=71 // pred_check_branch
          %757 = sbr.rel (%p755) target = $region76
        $region75: #{tpu_custom_call.1} parent=71 // pred_region
          %s758 = sand.u32 %s184, 1
          %s759 = scalar_lea.sflag [#allocation5], %s758
          %s760 = sand.u32 %s184, 1
          %s761 = smul.addr %s760, 32
          %s762 = scalar_lea.vmem [#allocation11], %s761
          %764 = dma.done %s759, 512
        $region76: #{tpu_custom_call.1} parent=71 // pred_fallthru
          _
      $region72: #{tpu_custom_call.1} parent=5 // pred_fallthru
        _
    $region6: #{tpu_custom_call.1} parent=1 // loop_footer
      %s24 = sadd.s32 1, %s20
    $region7: #{tpu_custom_call.1} parent=1 // loop_footer_branch
      %19 = sbr.rel target = $region3
    $region8: #{tpu_custom_call.1} parent=1 // loop_exit
      _
    %765 = vsyncpa [#allocation4], 1
    %s766 = scalar_lea.sflag [#allocation4], 1
    %767 = vsyncpa %s766, 1
    %768 = vsyncpa [#allocation5], 1
    %s769 = scalar_lea.sflag [#allocation5], 1
    %770 = vsyncpa %s769, 1
    %771 = vsyncpa [#allocation6], 1
    %s772 = scalar_lea.sflag [#allocation6], 1
    %773 = vsyncpa %s772, 1
    %774 = vsyncpa [#allocation9], 1

</llo_original>
